<compile_context>
chip_gen: v5e
topology: v5e:2x2
jax: 0.10.0
libtpu: 0.0.40
codegen_flags: <defaults>
</compile_context>

<pallas_src>
import functools

import jax
import jax.numpy as jnp
from jax import lax
from jax.experimental import pallas as pl
from jax.experimental.pallas import tpu as pltpu


# ---------------------------------------------------------------------------
# Kernel 1: per-pixel target-class softmax prob, per-pixel NLL, valid count.
# ---------------------------------------------------------------------------
def _stats_kernel(pred_ref, tgt_ref, prob_ref, nll_ref, cnt_ref, *,
                  ignore_label, nclass, valid_h):
    t = tgt_ref[0]                                            # (tile_h, Wp) int32
    tile_h = t.shape[0]
    row = (pl.program_id(1) * tile_h
           + lax.broadcasted_iota(jnp.int32, t.shape, 0))     # global row ids
    valid = jnp.logical_and(t != ignore_label, row < valid_h)
    t0 = jnp.where(valid, t, 0)

    def cls(ci):
        # One (tile_h, Wp) class slice, widened in-register; the full
        # (C, tile_h, Wp) block is never materialized in f32.
        return pred_ref[0, ci].astype(jnp.float32)

    if nclass <= 16:
        m = cls(0)
        for ci in range(1, nclass):
            m = jnp.maximum(m, cls(ci))
        z = jnp.zeros_like(m)
        logit_t = jnp.zeros_like(m)
        for ci in range(nclass):
            xc = cls(ci)
            z = z + jnp.exp(xc - m)
            logit_t = jnp.where(t0 == ci, xc, logit_t)        # select-accumulate
    else:
        # Bounded live ranges / code size for large C (e.g. ADE20K, 150 classes).
        m = lax.fori_loop(1, nclass, lambda ci, acc: jnp.maximum(acc, cls(ci)),
                          cls(0), unroll=4)

        def body(ci, carry):
            z, lt = carry
            xc = cls(ci)
            return z + jnp.exp(xc - m), jnp.where(t0 == ci, xc, lt)

        z, logit_t = lax.fori_loop(0, nclass, body,
                                   (jnp.zeros_like(m), jnp.zeros_like(m)),
                                   unroll=4)

    logz = m + jnp.log(z)
    nll = jnp.maximum(logz - logit_t, 0.0)    # clamp so valid pixels stay >= 0
    prob_t = jnp.exp(logit_t - logz)

    prob_ref[0] = jnp.where(valid, prob_t, 1.0)   # masked_fill_(~valid, 1)
    nll_ref[0] = jnp.where(valid, nll, -1.0)      # sign encodes validity

    # Per-block exact valid-pixel count, written lane-dense at [0, 0].
    cnt = jnp.sum(valid.astype(jnp.int32))
    r = lax.broadcasted_iota(jnp.int32, (8, 128), 0)
    c = lax.broadcasted_iota(jnp.int32, (8, 128), 1)
    cnt_ref[0] = jnp.where(jnp.logical_and(r == 0, c == 0), cnt, 0)


# ---------------------------------------------------------------------------
# Kernel 2: masked sum of NLL and kept-pixel count (per-block partials).
# ---------------------------------------------------------------------------
def _reduce_kernel(thr_ref, nll_ref, prob_ref, sum_ref, cnt_ref):
    thr = thr_ref[0]                      # effective OHEM threshold (2.0 = off)
    nll = nll_ref[0]                      # (tile_h, Wp)
    prob = prob_ref[0]                    # (tile_h, Wp)
    kept = jnp.logical_and(nll >= 0.0, prob <= thr)
    ksum = jnp.sum(jnp.where(kept, nll, 0.0))
    kcnt = jnp.sum(kept.astype(jnp.float32))

    r = lax.broadcasted_iota(jnp.int32, (8, 128), 0)
    c = lax.broadcasted_iota(jnp.int32, (8, 128), 1)
    at00 = jnp.logical_and(r == 0, c == 0)
    sum_ref[0] = jnp.where(at00, ksum, 0.0)
    cnt_ref[0] = jnp.where(at00, kcnt, 0.0)


# ---------------------------------------------------------------------------
# Tiling helpers.
# ---------------------------------------------------------------------------
def _sublane(dtype):
    return {2: 16, 1: 32}.get(jnp.dtype(dtype).itemsize, 8)


def _pick_tile_h(h, c, wp, dtype, budget_bytes):
    """Largest dtype-aligned tile_h whose (C, tile_h, Wp) pred block fits budget."""
    sub = _sublane(dtype)
    per_row = c * wp * jnp.dtype(dtype).itemsize
    rows = max(sub, int(budget_bytes) // max(per_row, 1))
    rows = max(sub, (rows // sub) * sub)
    h_ceil = ((h + sub - 1) // sub) * sub
    return min(rows, h_ceil)


# ---------------------------------------------------------------------------
# Wrapper.
# ---------------------------------------------------------------------------
def prob_ohem_cross_entropy_2d(pred, target, *, ignore_label, thresh=0.6,
                               min_kept=256, pred_block_bytes=4 << 20):
    b, c, h, w = pred.shape
    n_real = b * h * w
    tgt = target.astype(jnp.int32)

    # Pad W to a multiple of 128 once so all stores/loads are lane-dense.
    # Padded columns carry ignore_label -> prob 1.0 / nll -1.0, never kept.
    wp = ((w + 127) // 128) * 128
    if wp != w:
        pred = jnp.pad(pred, ((0, 0), (0, 0), (0, 0), (0, wp - w)))
        tgt = jnp.pad(tgt, ((0, 0), (0, 0), (0, wp - w)),
                      constant_values=ignore_label)

    tile_h = _pick_tile_h(h, c, wp, pred.dtype, pred_block_bytes)
    grid_h = pl.cdiv(h, tile_h)
    h_pad = grid_h * tile_h          # kernel-1 outputs tile exactly -> kernel-2 reuse

    pred_blk = c * tile_h * wp * pred.dtype.itemsize
    aux_blk = tile_h * wp * 4
    vmem_limit = int(min(max(2 * (pred_blk + 3 * aux_blk) + (4 << 20),
                             16 << 20), 40 << 20))

    # ---- Kernel 1: per-pixel target prob, NLL, per-block valid count ----
    prob, nll, cnt_blocks = pl.pallas_call(
        functools.partial(_stats_kernel, ignore_label=ignore_label, nclass=c,
                          valid_h=h),
        out_shape=(jax.ShapeDtypeStruct((b, h_pad, wp), jnp.float32),
                   jax.ShapeDtypeStruct((b, h_pad, wp), jnp.float32),
                   jax.ShapeDtypeStruct((b, grid_h * 8, 128), jnp.int32)),
        grid=(b, grid_h),
        in_specs=[
            pl.BlockSpec((1, c, tile_h, wp), lambda ib, ih: (ib, 0, ih, 0)),
            pl.BlockSpec((1, tile_h, wp), lambda ib, ih: (ib, ih, 0)),
        ],
        out_specs=(
            pl.BlockSpec((1, tile_h, wp), lambda ib, ih: (ib, ih, 0)),
            pl.BlockSpec((1, tile_h, wp), lambda ib, ih: (ib, ih, 0)),
            pl.BlockSpec((1, 8, 128), lambda ib, ih: (ib, ih, 0)),
        ),
        # TODO(synk): on v7x verify "parallel" shards the grid across both
        # TensorCores; otherwise add an explicit CORE_PARALLEL leading axis.
        compiler_params=pltpu.CompilerParams(
            dimension_semantics=("parallel", "parallel"),
            vmem_limit_bytes=vmem_limit),
    )(pred, tgt)

    num_valid = jnp.sum(cnt_blocks)        # exact int32, no extra target pass

    # ---- OHEM threshold: k-th smallest target-class probability ----
    # TODO(synk): the k-th-smallest selection (torch argsort) stays in XLA as a
    # two-stage lax.top_k; sorting/top-k has no clean Pallas TPU primitive.
    if min_kept > 0:
        k = min(n_real, int(min_kept))
        flat = prob.reshape(-1)            # leading-dim collapse of (b,h_pad,wp)
        blk = 4096
        if flat.shape[0] > 4 * blk and k <= blk:
            nb = -(-flat.shape[0] // blk)
            if nb * blk != flat.shape[0]:
                flat = jnp.pad(flat, (0, nb * blk - flat.shape[0]),
                               constant_values=1.0)
            cand = -lax.top_k(-flat.reshape(nb, blk), k)[0]   # per-block k-min
            kth = -lax.top_k(-cand.reshape(-1), k)[0][k - 1]
        else:
            kth = -lax.top_k(-flat, k)[0][k - 1]
        threshold = jnp.maximum(kth, jnp.float32(thresh))
    else:
        threshold = jnp.float32(thresh)

    # OHEM filtering applies iff min_kept <= num_valid and num_valid > 0
    # (torch: `if min_kept > num_valid: pass / elif num_valid > 0:`).
    # Fold into the threshold: prob <= 2.0 keeps every valid pixel.
    use_ohem = jnp.logical_and(num_valid >= jnp.int32(min_kept), num_valid > 0)
    thr_eff = jnp.where(use_ohem, threshold, jnp.float32(2.0))
    scal = thr_eff.reshape(1).astype(jnp.float32)

    # ---- Kernel 2: masked NLL sum + kept count, native (b, h_pad, wp) tiles ----
    sum_part, cnt_part = pl.pallas_call(
        _reduce_kernel,
        out_shape=(jax.ShapeDtypeStruct((b, grid_h * 8, 128), jnp.float32),
                   jax.ShapeDtypeStruct((b, grid_h * 8, 128), jnp.float32)),
        grid=(b, grid_h),
        in_specs=[
            pl.BlockSpec(memory_space=pltpu.MemorySpace.SMEM),
            pl.BlockSpec((1, tile_h, wp), lambda ib, ih: (ib, ih, 0)),
            pl.BlockSpec((1, tile_h, wp), lambda ib, ih: (ib, ih, 0)),
        ],
        out_specs=(
            pl.BlockSpec((1, 8, 128), lambda ib, ih: (ib, ih, 0)),
            pl.BlockSpec((1, 8, 128), lambda ib, ih: (ib, ih, 0)),
        ),
        compiler_params=pltpu.CompilerParams(
            dimension_semantics=("parallel", "parallel"),
            vmem_limit_bytes=vmem_limit),
    )(scal, nll, prob)

    # reduction='mean' with ignore_index -> mean over kept pixels
    # (0/0 -> NaN when everything is ignored, same as torch).
    return jnp.sum(sum_part) / jnp.sum(cnt_part)


# ---------------------------------------------------------------------------
# Pure-JAX reference mirroring the PyTorch module semantics.
# ---------------------------------------------------------------------------
def _reference_loss(pred, target, ignore_label, thresh, min_kept):
    b, c, h, w = pred.shape
    n = b * h * w
    tgt = target.reshape(-1).astype(jnp.int32)
    valid = tgt != ignore_label
    t0 = jnp.where(valid, tgt, 0)
    num_valid = jnp.sum(valid)
    logits = jnp.transpose(pred, (0, 2, 3, 1)).reshape(n, c).astype(jnp.float32)
    logp = jax.nn.log_softmax(logits, axis=-1)
    prob = jnp.exp(logp)
    mask_prob = jnp.where(valid, prob[jnp.arange(n), t0], 1.0)
    if min_kept > 0:
        k = min(n, int(min_kept))
        kth = jnp.sort(mask_prob)[k - 1]
        threshold = jnp.where(kth > thresh, kth, jnp.float32(thresh))
    else:
        threshold = jnp.float32(thresh)
    use_ohem = jnp.logical_and(num_valid >= min_kept, num_valid > 0)
    kept = jnp.where(use_ohem, valid & (mask_prob <= threshold), valid)
    nll = -logp[jnp.arange(n), t0]
    keptf = kept.astype(jnp.float32)
    return jnp.sum(nll * keptf) / jnp.sum(keptf)


if __name__ == "__main__":
    b, c, h, w = 2, 8, 16, 16
    ignore_label = 255
    thresh = 0.6
    min_kept = 100

    key = jax.random.PRNGKey(0)
    k1, k2, k3 = jax.random.split(key, 3)
    pred = jax.random.normal(k1, (b, c, h, w), dtype=jnp.float32) * 2.0
    target = jax.random.randint(k2, (b, h, w), 0, c).astype(jnp.int32)
    ignore = jax.random.bernoulli(k3, 0.2, (b, h, w))
    target = jnp.where(ignore, jnp.int32(ignore_label), target)

    loss = prob_ohem_cross_entropy_2d(
        pred, target, ignore_label=ignore_label, thresh=thresh,
        min_kept=min_kept)
    loss = jax.block_until_ready(loss)

    ref = _reference_loss(pred, target, ignore_label, thresh, min_kept)
    assert jnp.isfinite(loss), f"loss is not finite: {loss}"
    assert jnp.allclose(loss, ref, rtol=1e-3, atol=1e-5), (loss, ref)
    print("KERNEL_OK")
</pallas_src>

<mosaic_0001>
module attributes {stable_mosaic.version = 11 : i64} {
  func.func @_stats_kernel(%arg0: i32, %arg1: i32, %arg2: memref<1x8x16x128xf32, #tpu.memory_space<vmem>>, %arg3: memref<1x16x128xi32, #tpu.memory_space<vmem>>, %arg4: memref<1x16x128xf32, #tpu.memory_space<vmem>>, %arg5: memref<1x16x128xf32, #tpu.memory_space<vmem>>, %arg6: memref<1x8x128xi32, #tpu.memory_space<vmem>>) attributes {dimension_semantics = [#tpu.dimension_semantics<parallel>, #tpu.dimension_semantics<parallel>], iteration_bounds = array<i64: 2, 1>, scalar_prefetch = 0 : i64, scratch_operands = 0 : i64, tpu.core_type = #tpu.core_type<tc>, window_params = [{transform_indices = @transform_0, window_bounds = array<i64: 1, 8, 16, 128>}, {transform_indices = @transform_1, window_bounds = array<i64: 1, 16, 128>}, {transform_indices = @transform_2, window_bounds = array<i64: 1, 16, 128>}, {transform_indices = @transform_3, window_bounds = array<i64: 1, 16, 128>}, {transform_indices = @transform_4, window_bounds = array<i64: 1, 8, 128>}]} {
    %c0 = arith.constant 0 : index
    %c0_0 = arith.constant 0 : index
    %c0_1 = arith.constant 0 : index
    %0 = vector.load %arg3[%c0, %c0_0, %c0_1] : memref<1x16x128xi32, #tpu.memory_space<vmem>>, vector<1x16x128xi32>
    %1 = vector.shape_cast %0 : vector<1x16x128xi32> to vector<16x128xi32>
    %c16_i32 = arith.constant 16 : i32
    %2 = arith.muli %arg1, %c16_i32 : i32
    %3 = tpu.iota {dimensions = array<i32: 0>} : vector<16x128xi32>
    %4 = vector.broadcast %2 : i32 to vector<16x128xi32>
    %5 = arith.addi %4, %3 : vector<16x128xi32>
    %c255_i32 = arith.constant 255 : i32
    %6 = vector.broadcast %c255_i32 : i32 to vector<16x128xi32>
    %7 = arith.cmpi ne, %1, %6 : vector<16x128xi32>
    %c16_i32_2 = arith.constant 16 : i32
    %8 = vector.broadcast %c16_i32_2 : i32 to vector<16x128xi32>
    %9 = arith.cmpi slt, %5, %8 : vector<16x128xi32>
    %10 = arith.andi %7, %9 : vector<16x128xi1>
    %c0_i32 = arith.constant 0 : i32
    %11 = vector.broadcast %c0_i32 : i32 to vector<16x128xi32>
    %12 = arith.select %10, %1, %11 : vector<16x128xi1>, vector<16x128xi32>
    %c0_3 = arith.constant 0 : index
    %c0_4 = arith.constant 0 : index
    %c0_5 = arith.constant 0 : index
    %c0_6 = arith.constant 0 : index
    %13 = vector.load %arg2[%c0_3, %c0_4, %c0_5, %c0_6] : memref<1x8x16x128xf32, #tpu.memory_space<vmem>>, vector<1x1x16x128xf32>
    %14 = vector.shape_cast %13 : vector<1x1x16x128xf32> to vector<16x128xf32>
    %c0_7 = arith.constant 0 : index
    %c1 = arith.constant 1 : index
    %c0_8 = arith.constant 0 : index
    %c0_9 = arith.constant 0 : index
    %15 = vector.load %arg2[%c0_7, %c1, %c0_8, %c0_9] : memref<1x8x16x128xf32, #tpu.memory_space<vmem>>, vector<1x1x16x128xf32>
    %16 = vector.shape_cast %15 : vector<1x1x16x128xf32> to vector<16x128xf32>
    %17 = arith.maximumf %14, %16 : vector<16x128xf32>
    %c0_10 = arith.constant 0 : index
    %c2 = arith.constant 2 : index
    %c0_11 = arith.constant 0 : index
    %c0_12 = arith.constant 0 : index
    %18 = vector.load %arg2[%c0_10, %c2, %c0_11, %c0_12] : memref<1x8x16x128xf32, #tpu.memory_space<vmem>>, vector<1x1x16x128xf32>
    %19 = vector.shape_cast %18 : vector<1x1x16x128xf32> to vector<16x128xf32>
    %20 = arith.maximumf %17, %19 : vector<16x128xf32>
    %c0_13 = arith.constant 0 : index
    %c3 = arith.constant 3 : index
    %c0_14 = arith.constant 0 : index
    %c0_15 = arith.constant 0 : index
    %21 = vector.load %arg2[%c0_13, %c3, %c0_14, %c0_15] : memref<1x8x16x128xf32, #tpu.memory_space<vmem>>, vector<1x1x16x128xf32>
    %22 = vector.shape_cast %21 : vector<1x1x16x128xf32> to vector<16x128xf32>
    %23 = arith.maximumf %20, %22 : vector<16x128xf32>
    %c0_16 = arith.constant 0 : index
    %c4 = arith.constant 4 : index
    %c0_17 = arith.constant 0 : index
    %c0_18 = arith.constant 0 : index
    %24 = vector.load %arg2[%c0_16, %c4, %c0_17, %c0_18] : memref<1x8x16x128xf32, #tpu.memory_space<vmem>>, vector<1x1x16x128xf32>
    %25 = vector.shape_cast %24 : vector<1x1x16x128xf32> to vector<16x128xf32>
    %26 = arith.maximumf %23, %25 : vector<16x128xf32>
    %c0_19 = arith.constant 0 : index
    %c5 = arith.constant 5 : index
    %c0_20 = arith.constant 0 : index
    %c0_21 = arith.constant 0 : index
    %27 = vector.load %arg2[%c0_19, %c5, %c0_20, %c0_21] : memref<1x8x16x128xf32, #tpu.memory_space<vmem>>, vector<1x1x16x128xf32>
    %28 = vector.shape_cast %27 : vector<1x1x16x128xf32> to vector<16x128xf32>
    %29 = arith.maximumf %26, %28 : vector<16x128xf32>
    %c0_22 = arith.constant 0 : index
    %c6 = arith.constant 6 : index
    %c0_23 = arith.constant 0 : index
    %c0_24 = arith.constant 0 : index
    %30 = vector.load %arg2[%c0_22, %c6, %c0_23, %c0_24] : memref<1x8x16x128xf32, #tpu.memory_space<vmem>>, vector<1x1x16x128xf32>
    %31 = vector.shape_cast %30 : vector<1x1x16x128xf32> to vector<16x128xf32>
    %32 = arith.maximumf %29, %31 : vector<16x128xf32>
    %c0_25 = arith.constant 0 : index
    %c7 = arith.constant 7 : index
    %c0_26 = arith.constant 0 : index
    %c0_27 = arith.constant 0 : index
    %33 = vector.load %arg2[%c0_25, %c7, %c0_26, %c0_27] : memref<1x8x16x128xf32, #tpu.memory_space<vmem>>, vector<1x1x16x128xf32>
    %34 = vector.shape_cast %33 : vector<1x1x16x128xf32> to vector<16x128xf32>
    %35 = arith.maximumf %32, %34 : vector<16x128xf32>
    %cst = arith.constant 0.000000e+00 : f32
    %36 = vector.broadcast %cst : f32 to vector<16x128xf32>
    %cst_28 = arith.constant 0.000000e+00 : f32
    %37 = vector.broadcast %cst_28 : f32 to vector<16x128xf32>
    %c0_29 = arith.constant 0 : index
    %c0_30 = arith.constant 0 : index
    %c0_31 = arith.constant 0 : index
    %c0_32 = arith.constant 0 : index
    %38 = vector.load %arg2[%c0_29, %c0_30, %c0_31, %c0_32] : memref<1x8x16x128xf32, #tpu.memory_space<vmem>>, vector<1x1x16x128xf32>
    %39 = vector.shape_cast %38 : vector<1x1x16x128xf32> to vector<16x128xf32>
    %40 = arith.subf %39, %35 : vector<16x128xf32>
    %41 = math.exp %40 : vector<16x128xf32>
    %42 = arith.addf %36, %41 : vector<16x128xf32>
    %c0_i32_33 = arith.constant 0 : i32
    %43 = vector.broadcast %c0_i32_33 : i32 to vector<16x128xi32>
    %44 = arith.cmpi eq, %12, %43 : vector<16x128xi32>
    %45 = arith.select %44, %39, %37 : vector<16x128xi1>, vector<16x128xf32>
    %c0_34 = arith.constant 0 : index
    %c1_35 = arith.constant 1 : index
    %c0_36 = arith.constant 0 : index
    %c0_37 = arith.constant 0 : index
    %46 = vector.load %arg2[%c0_34, %c1_35, %c0_36, %c0_37] : memref<1x8x16x128xf32, #tpu.memory_space<vmem>>, vector<1x1x16x128xf32>
    %47 = vector.shape_cast %46 : vector<1x1x16x128xf32> to vector<16x128xf32>
    %48 = arith.subf %47, %35 : vector<16x128xf32>
    %49 = math.exp %48 : vector<16x128xf32>
    %50 = arith.addf %42, %49 : vector<16x128xf32>
    %c1_i32 = arith.constant 1 : i32
    %51 = vector.broadcast %c1_i32 : i32 to vector<16x128xi32>
    %52 = arith.cmpi eq, %12, %51 : vector<16x128xi32>
    %53 = arith.select %52, %47, %45 : vector<16x128xi1>, vector<16x128xf32>
    %c0_38 = arith.constant 0 : index
    %c2_39 = arith.constant 2 : index
    %c0_40 = arith.constant 0 : index
    %c0_41 = arith.constant 0 : index
    %54 = vector.load %arg2[%c0_38, %c2_39, %c0_40, %c0_41] : memref<1x8x16x128xf32, #tpu.memory_space<vmem>>, vector<1x1x16x128xf32>
    %55 = vector.shape_cast %54 : vector<1x1x16x128xf32> to vector<16x128xf32>
    %56 = arith.subf %55, %35 : vector<16x128xf32>
    %57 = math.exp %56 : vector<16x128xf32>
    %58 = arith.addf %50, %57 : vector<16x128xf32>
    %c2_i32 = arith.constant 2 : i32
    %59 = vector.broadcast %c2_i32 : i32 to vector<16x128xi32>
    %60 = arith.cmpi eq, %12, %59 : vector<16x128xi32>
    %61 = arith.select %60, %55, %53 : vector<16x128xi1>, vector<16x128xf32>
    %c0_42 = arith.constant 0 : index
    %c3_43 = arith.constant 3 : index
    %c0_44 = arith.constant 0 : index
    %c0_45 = arith.constant 0 : index
    %62 = vector.load %arg2[%c0_42, %c3_43, %c0_44, %c0_45] : memref<1x8x16x128xf32, #tpu.memory_space<vmem>>, vector<1x1x16x128xf32>
    %63 = vector.shape_cast %62 : vector<1x1x16x128xf32> to vector<16x128xf32>
    %64 = arith.subf %63, %35 : vector<16x128xf32>
    %65 = math.exp %64 : vector<16x128xf32>
    %66 = arith.addf %58, %65 : vector<16x128xf32>
    %c3_i32 = arith.constant 3 : i32
    %67 = vector.broadcast %c3_i32 : i32 to vector<16x128xi32>
    %68 = arith.cmpi eq, %12, %67 : vector<16x128xi32>
    %69 = arith.select %68, %63, %61 : vector<16x128xi1>, vector<16x128xf32>
    %c0_46 = arith.constant 0 : index
    %c4_47 = arith.constant 4 : index
    %c0_48 = arith.constant 0 : index
    %c0_49 = arith.constant 0 : index
    %70 = vector.load %arg2[%c0_46, %c4_47, %c0_48, %c0_49] : memref<1x8x16x128xf32, #tpu.memory_space<vmem>>, vector<1x1x16x128xf32>
    %71 = vector.shape_cast %70 : vector<1x1x16x128xf32> to vector<16x128xf32>
    %72 = arith.subf %71, %35 : vector<16x128xf32>
    %73 = math.exp %72 : vector<16x128xf32>
    %74 = arith.addf %66, %73 : vector<16x128xf32>
    %c4_i32 = arith.constant 4 : i32
    %75 = vector.broadcast %c4_i32 : i32 to vector<16x128xi32>
    %76 = arith.cmpi eq, %12, %75 : vector<16x128xi32>
    %77 = arith.select %76, %71, %69 : vector<16x128xi1>, vector<16x128xf32>
    %c0_50 = arith.constant 0 : index
    %c5_51 = arith.constant 5 : index
    %c0_52 = arith.constant 0 : index
    %c0_53 = arith.constant 0 : index
    %78 = vector.load %arg2[%c0_50, %c5_51, %c0_52, %c0_53] : memref<1x8x16x128xf32, #tpu.memory_space<vmem>>, vector<1x1x16x128xf32>
    %79 = vector.shape_cast %78 : vector<1x1x16x128xf32> to vector<16x128xf32>
    %80 = arith.subf %79, %35 : vector<16x128xf32>
    %81 = math.exp %80 : vector<16x128xf32>
    %82 = arith.addf %74, %81 : vector<16x128xf32>
    %c5_i32 = arith.constant 5 : i32
    %83 = vector.broadcast %c5_i32 : i32 to vector<16x128xi32>
    %84 = arith.cmpi eq, %12, %83 : vector<16x128xi32>
    %85 = arith.select %84, %79, %77 : vector<16x128xi1>, vector<16x128xf32>
    %c0_54 = arith.constant 0 : index
    %c6_55 = arith.constant 6 : index
    %c0_56 = arith.constant 0 : index
    %c0_57 = arith.constant 0 : index
    %86 = vector.load %arg2[%c0_54, %c6_55, %c0_56, %c0_57] : memref<1x8x16x128xf32, #tpu.memory_space<vmem>>, vector<1x1x16x128xf32>
    %87 = vector.shape_cast %86 : vector<1x1x16x128xf32> to vector<16x128xf32>
    %88 = arith.subf %87, %35 : vector<16x128xf32>
    %89 = math.exp %88 : vector<16x128xf32>
    %90 = arith.addf %82, %89 : vector<16x128xf32>
    %c6_i32 = arith.constant 6 : i32
    %91 = vector.broadcast %c6_i32 : i32 to vector<16x128xi32>
    %92 = arith.cmpi eq, %12, %91 : vector<16x128xi32>
    %93 = arith.select %92, %87, %85 : vector<16x128xi1>, vector<16x128xf32>
    %c0_58 = arith.constant 0 : index
    %c7_59 = arith.constant 7 : index
    %c0_60 = arith.constant 0 : index
    %c0_61 = arith.constant 0 : index
    %94 = vector.load %arg2[%c0_58, %c7_59, %c0_60, %c0_61] : memref<1x8x16x128xf32, #tpu.memory_space<vmem>>, vector<1x1x16x128xf32>
    %95 = vector.shape_cast %94 : vector<1x1x16x128xf32> to vector<16x128xf32>
    %96 = arith.subf %95, %35 : vector<16x128xf32>
    %97 = math.exp %96 : vector<16x128xf32>
    %98 = arith.addf %90, %97 : vector<16x128xf32>
    %c7_i32 = arith.constant 7 : i32
    %99 = vector.broadcast %c7_i32 : i32 to vector<16x128xi32>
    %100 = arith.cmpi eq, %12, %99 : vector<16x128xi32>
    %101 = arith.select %100, %95, %93 : vector<16x128xi1>, vector<16x128xf32>
    %102 = math.log %98 : vector<16x128xf32>
    %103 = arith.addf %35, %102 : vector<16x128xf32>
    %104 = arith.subf %103, %101 : vector<16x128xf32>
    %cst_62 = arith.constant 0.000000e+00 : f32
    %105 = vector.broadcast %cst_62 : f32 to vector<16x128xf32>
    %106 = arith.maximumf %104, %105 : vector<16x128xf32>
    %107 = arith.subf %101, %103 : vector<16x128xf32>
    %108 = math.exp %107 : vector<16x128xf32>
    %cst_63 = arith.constant 1.000000e+00 : f32
    %109 = vector.broadcast %cst_63 : f32 to vector<16x128xf32>
    %110 = arith.select %10, %108, %109 : vector<16x128xi1>, vector<16x128xf32>
    %c0_64 = arith.constant 0 : index
    %c0_65 = arith.constant 0 : index
    %c0_66 = arith.constant 0 : index
    %111 = vector.load %arg4[%c0_64, %c0_65, %c0_66] : memref<1x16x128xf32, #tpu.memory_space<vmem>>, vector<1x16x128xf32>
    %112 = vector.shape_cast %111 : vector<1x16x128xf32> to vector<16x128xf32>
    %113 = vector.shape_cast %110 : vector<16x128xf32> to vector<1x16x128xf32>
    tpu.vector_store %arg4[%c0_64, %c0_65, %c0_66], %113 {strides = array<i32>} : memref<1x16x128xf32, #tpu.memory_space<vmem>>, vector<1x16x128xf32>,
    %cst_67 = arith.constant -1.000000e+00 : f32
    %114 = vector.broadcast %cst_67 : f32 to vector<16x128xf32>
    %115 = arith.select %10, %106, %114 : vector<16x128xi1>, vector<16x128xf32>
    %c0_68 = arith.constant 0 : index
    %c0_69 = arith.constant 0 : index
    %c0_70 = arith.constant 0 : index
    %116 = vector.load %arg5[%c0_68, %c0_69, %c0_70] : memref<1x16x128xf32, #tpu.memory_space<vmem>>, vector<1x16x128xf32>
    %117 = vector.shape_cast %116 : vector<1x16x128xf32> to vector<16x128xf32>
    %118 = vector.shape_cast %115 : vector<16x128xf32> to vector<1x16x128xf32>
    tpu.vector_store %arg5[%c0_68, %c0_69, %c0_70], %118 {strides = array<i32>} : memref<1x16x128xf32, #tpu.memory_space<vmem>>, vector<1x16x128xf32>,
    %119 = arith.extui %10 : vector<16x128xi1> to vector<16x128xi32>
    %120 = vector.shape_cast %119 : vector<16x128xi32> to vector<1x16x128xi32>
    %cst_71 = arith.constant dense<0> : vector<1xi32>
    %121 = vector.multi_reduction <add>, %120, %cst_71 [1, 2] : vector<1x16x128xi32> to vector<1xi32>
    %122 = vector.shape_cast %121 : vector<1xi32> to vector<1x1x1xi32>
    %123 = vector.extract %122[0, 0, 0] : i32 from vector<1x1x1xi32>
    %124 = tpu.iota {dimensions = array<i32: 0>} : vector<8x128xi32>
    %125 = tpu.iota {dimensions = array<i32: 1>} : vector<8x128xi32>
    %c0_i32_72 = arith.constant 0 : i32
    %126 = vector.broadcast %c0_i32_72 : i32 to vector<8x128xi32>
    %127 = arith.cmpi eq, %124, %126 : vector<8x128xi32>
    %c0_i32_73 = arith.constant 0 : i32
    %128 = vector.broadcast %c0_i32_73 : i32 to vector<8x128xi32>
    %129 = arith.cmpi eq, %125, %128 : vector<8x128xi32>
    %130 = arith.andi %127, %129 : vector<8x128xi1>
    %c0_i32_74 = arith.constant 0 : i32
    %131 = vector.broadcast %123 : i32 to vector<8x128xi32>
    %132 = vector.broadcast %c0_i32_74 : i32 to vector<8x128xi32>
    %133 = arith.select %130, %131, %132 : vector<8x128xi1>, vector<8x128xi32>
    %c0_75 = arith.constant 0 : index
    %c0_76 = arith.constant 0 : index
    %c0_77 = arith.constant 0 : index
    %134 = vector.load %arg6[%c0_75, %c0_76, %c0_77] : memref<1x8x128xi32, #tpu.memory_space<vmem>>, vector<1x8x128xi32>
    %135 = vector.shape_cast %134 : vector<1x8x128xi32> to vector<8x128xi32>
    %136 = vector.shape_cast %133 : vector<8x128xi32> to vector<1x8x128xi32>
    tpu.vector_store %arg6[%c0_75, %c0_76, %c0_77], %136 {strides = array<i32>} : memref<1x8x128xi32, #tpu.memory_space<vmem>>, vector<1x8x128xi32>,
    return
  }
  func.func @transform_0(%arg0: i32, %arg1: i32) -> (i32, i32, i32, i32) {
    %c0_i32 = arith.constant 0 : i32
    %c0_i32_0 = arith.constant 0 : i32
    %c0_i32_1 = arith.constant 0 : i32
    return %arg0, %c0_i32, %arg1, %c0_i32_0 : i32, i32, i32, i32
  }
  func.func @transform_1(%arg0: i32, %arg1: i32) -> (i32, i32, i32) {
    %c0_i32 = arith.constant 0 : i32
    %c0_i32_0 = arith.constant 0 : i32
    return %arg0, %arg1, %c0_i32 : i32, i32, i32
  }
  func.func @transform_2(%arg0: i32, %arg1: i32) -> (i32, i32, i32) {
    %c0_i32 = arith.constant 0 : i32
    %c0_i32_0 = arith.constant 0 : i32
    return %arg0, %arg1, %c0_i32 : i32, i32, i32
  }
  func.func @transform_3(%arg0: i32, %arg1: i32) -> (i32, i32, i32) {
    %c0_i32 = arith.constant 0 : i32
    %c0_i32_0 = arith.constant 0 : i32
    return %arg0, %arg1, %c0_i32 : i32, i32, i32
  }
  func.func @transform_4(%arg0: i32, %arg1: i32) -> (i32, i32, i32) {
    %c0_i32 = arith.constant 0 : i32
    %c0_i32_0 = arith.constant 0 : i32
    return %arg0, %arg1, %c0_i32 : i32, i32, i32
  }
}

</mosaic_0001>

<llo_original>
// kernel: tpu_custom_call.1
$region0: #{tpu_custom_call.1}
  #allocation0 [shape = 'u32[]', space=smem, size = 0x4, offset = 0x4, fixed_abs, tag = 'smem constant byte address 0x4 - core index']
  #allocation1 [shape = 'u32[72,128]{1,0:T(1,128)}', space=vmem, size = 0x9000, scoped, tag = 'internal scratch']
  %s0 = inlined_call_operand.hbm [shape: f32[2,8,16,128], index: 0, kind: input, shape index: {}]
  %s1 = inlined_call_operand.hbm [shape: s32[2,16,128], index: 1, kind: input, shape index: {}]
  %s2 = inlined_call_operand.hbm [shape: f32[2,16,128], index: 2, kind: output, shape index: {0}]
  %s3 = inlined_call_operand.hbm [shape: f32[2,16,128], index: 3, kind: output, shape index: {1}]
  %s4 = inlined_call_operand.hbm [shape: s32[2,8,128], index: 4, kind: output, shape index: {2}]
  %5 = xla_tuple %s2, %s3, %s4
  %s6 = sld [smem:[#allocation0]]
  $region65: #{tpu_custom_call.1} parent=0
    _
  %s8 = ssub.s32 1, %s6
  %s9 = scalar_select 0, %s8, %s6
  $region1: #{tpu_custom_call.1} parent=0
    #allocation2 [shape = 'u8[131072]{0}', space=vmem, size = 0x20000, scoped, tag = 'input window, operand 0']
    #allocation3 [shape = 's32[2]{0}', space=sflag, size = 0x8, scoped, tag = 'scoped memory for tpu_custom_call.1']
    #allocation4 [shape = 's32[2]{0}', space=sflag, size = 0x8, scoped, tag = 'scoped memory for tpu_custom_call.1']
    #allocation5 [shape = 'u8[16384]{0}', space=vmem, size = 0x4000, scoped, tag = 'input window, operand 1']
    #allocation6 [shape = 's32[2]{0}', space=sflag, size = 0x8, scoped, tag = 'scoped memory for tpu_custom_call.1']
    #allocation7 [shape = 'u8[16384]{0}', space=vmem, size = 0x4000, scoped, tag = 'output window, operand 0']
    #allocation8 [shape = 'u8[16384]{0}', space=vmem, size = 0x4000, scoped, tag = 'output window, operand 1']
    #allocation9 [shape = 's32[2]{0}', space=sflag, size = 0x8, scoped, tag = 'scoped memory for tpu_custom_call.1']
    #allocation10 [shape = 'u8[8192]{0}', space=vmem, size = 0x2000, scoped, tag = 'output window, operand 2']
    %10 = vsyncpa [#allocation3], 0
    %s11 = scalar_lea.sflag [#allocation3], 1
    %12 = vsyncpa %s11, 0
    %13 = vsyncpa [#allocation6], 0
    %s14 = scalar_lea.sflag [#allocation6], 1
    %15 = vsyncpa %s14, 0
    %16 = vsyncpa [#allocation4], 0
    %s17 = scalar_lea.sflag [#allocation4], 1
    %18 = vsyncpa %s17, 0
    %19 = vsyncpa [#allocation9], 0
    %s20 = scalar_lea.sflag [#allocation9], 1
    %21 = vsyncpa %s20, 0
    loop: start=0, step=1, limit=4
    $region2: #{tpu_custom_call.1} parent=1 // loop_pre_header
      _
    $region3: #{tpu_custom_call.1} parent=1 // loop_header
      %s23 = sphi 0, %s27
      %p24 = scmp.ge.s32.totalorder %s23, 4
      %s30 = sphi 0, %s42
      %s31 = sphi 0, %s38
      %s32 = sphi 0, %s30
      %s33 = sphi 0, %s31
      %s34 = sphi 0, %s32
      %s35 = sphi 0, %s33
      %s47 = sphi 0, %s49
      %s50 = sphi 0, %s47
      %s51 = sphi 0, %s50
      %s67 = sphi 0, %s51
      %s75 = sphi 0, %s77
      %s78 = sphi 0, %s75
      %s79 = sphi 0, %s78
      %s95 = sphi 0, %s79
      %s103 = sphi 0, %s105
      %s106 = sphi 0, %s103
      %s107 = sphi 0, %s106
      %s123 = sphi 0, %s107
      %s131 = sphi 0, %s133
      %s134 = sphi 0, %s131
      %s135 = sphi 0, %s134
      %s151 = sphi 0, %s135
      %s159 = sphi 0, %s161
      %s162 = sphi 0, %s159
      %s163 = sphi 0, %s162
      %s179 = sphi 0, %s163
    $region4: #{tpu_custom_call.1} parent=1 // loop_header_branch
      %26 = sbr.rel (%p24) target = $region8
    $region5: #{tpu_custom_call.1} parent=1 // loop_body
      %s28 = ssub.s32 %s23, 1
      %s29 = ssub.s32 %s23, 2
      %s36 = sadd.s32 1, %s31
      %p37 = scmp.ge.s32.totalorder %s36, 1
      %s38 = scalar_select %p37, 0, %s36
      %s39 = sadd.s32 1, %s30
      %s40 = scalar_select %p37, %s39, %s30
      %p41 = scmp.ge.s32.totalorder %s40, 2
      %s42 = scalar_select %p41, 0, %s40
      %s43 = ssub.s32 %s30, %s42
      %s44 = ssub.s32 %s31, %s38
      %s45 = sor.u32 %s43, %s44
      %p46 = scmp.eq.s32.totalorder %s45, 0
      %s48 = sadd.s32 %s47, 1
      %s49 = scalar_select %p46, %s47, %s48
      %p52 = pneg %p46
      %p53 = scmp.eq.s32.totalorder %s23, 1
      %p54 = por %p52, %p53
      %p55 = scmp.ne.s32.totalorder %s47, %s50
      %p56 = scmp.eq.s32.totalorder %s23, 0
      %p57 = por %p55, %p56
      %p58 = scmp.ne.s32.totalorder %s47, %s50
      %p59 = scmp.eq.s32.totalorder %s28, 1
      %p60 = por %p58, %p59
      %p61 = scmp.ne.s32.totalorder %s50, %s51
      %p62 = scmp.eq.s32.totalorder %s28, 0
      %p63 = por %p61, %p62
      %p64 = scmp.ne.s32.totalorder %s50, %s51
      %p65 = scmp.eq.s32.totalorder %s29, 1
      %p66 = por %p64, %p65
      %p68 = scmp.ne.s32.totalorder %s51, %s67
      %p69 = scmp.eq.s32.totalorder %s29, 0
      %p70 = por %p68, %p69
      %s71 = ssub.s32 %s30, %s42
      %s72 = ssub.s32 %s31, %s38
      %s73 = sor.u32 %s71, %s72
      %p74 = scmp.eq.s32.totalorder %s73, 0
      %s76 = sadd.s32 %s75, 1
      %s77 = scalar_select %p74, %s75, %s76
      %p80 = pneg %p74
      %p81 = scmp.eq.s32.totalorder %s23, 1
      %p82 = por %p80, %p81
      %p83 = scmp.ne.s32.totalorder %s75, %s78
      %p84 = scmp.eq.s32.totalorder %s23, 0
      %p85 = por %p83, %p84
      %p86 = scmp.ne.s32.totalorder %s75, %s78
      %p87 = scmp.eq.s32.totalorder %s28, 1
      %p88 = por %p86, %p87
      %p89 = scmp.ne.s32.totalorder %s78, %s79
      %p90 = scmp.eq.s32.totalorder %s28, 0
      %p91 = por %p89, %p90
      %p92 = scmp.ne.s32.totalorder %s78, %s79
      %p93 = scmp.eq.s32.totalorder %s29, 1
      %p94 = por %p92, %p93
      %p96 = scmp.ne.s32.totalorder %s79, %s95
      %p97 = scmp.eq.s32.totalorder %s29, 0
      %p98 = por %p96, %p97
      %s99 = ssub.s32 %s30, %s42
      %s100 = ssub.s32 %s31, %s38
      %s101 = sor.u32 %s99, %s100
      %p102 = scmp.eq.s32.totalorder %s101, 0
      %s104 = sadd.s32 %s103, 1
      %s105 = scalar_select %p102, %s103, %s104
      %p108 = pneg %p102
      %p109 = scmp.eq.s32.totalorder %s23, 1
      %p110 = por %p108, %p109
      %p111 = scmp.ne.s32.totalorder %s103, %s106
      %p112 = scmp.eq.s32.totalorder %s23, 0
      %p113 = por %p111, %p112
      %p114 = scmp.ne.s32.totalorder %s103, %s106
      %p115 = scmp.eq.s32.totalorder %s28, 1
      %p116 = por %p114, %p115
      %p117 = scmp.ne.s32.totalorder %s106, %s107
      %p118 = scmp.eq.s32.totalorder %s28, 0
      %p119 = por %p117, %p118
      %p120 = scmp.ne.s32.totalorder %s106, %s107
      %p121 = scmp.eq.s32.totalorder %s29, 1
      %p122 = por %p120, %p121
      %p124 = scmp.ne.s32.totalorder %s107, %s123
      %p125 = scmp.eq.s32.totalorder %s29, 0
      %p126 = por %p124, %p125
      %s127 = ssub.s32 %s30, %s42
      %s128 = ssub.s32 %s31, %s38
      %s129 = sor.u32 %s127, %s128
      %p130 = scmp.eq.s32.totalorder %s129, 0
      %s132 = sadd.s32 %s131, 1
      %s133 = scalar_select %p130, %s131, %s132
      %p136 = pneg %p130
      %p137 = scmp.eq.s32.totalorder %s23, 1
      %p138 = por %p136, %p137
      %p139 = scmp.ne.s32.totalorder %s131, %s134
      %p140 = scmp.eq.s32.totalorder %s23, 0
      %p141 = por %p139, %p140
      %p142 = scmp.ne.s32.totalorder %s131, %s134
      %p143 = scmp.eq.s32.totalorder %s28, 1
      %p144 = por %p142, %p143
      %p145 = scmp.ne.s32.totalorder %s134, %s135
      %p146 = scmp.eq.s32.totalorder %s28, 0
      %p147 = por %p145, %p146
      %p148 = scmp.ne.s32.totalorder %s134, %s135
      %p149 = scmp.eq.s32.totalorder %s29, 1
      %p150 = por %p148, %p149
      %p152 = scmp.ne.s32.totalorder %s135, %s151
      %p153 = scmp.eq.s32.totalorder %s29, 0
      %p154 = por %p152, %p153
      %s155 = ssub.s32 %s30, %s42
      %s156 = ssub.s32 %s31, %s38
      %s157 = sor.u32 %s155, %s156
      %p158 = scmp.eq.s32.totalorder %s157, 0
      %s160 = sadd.s32 %s159, 1
      %s161 = scalar_select %p158, %s159, %s160
      %p164 = pneg %p158
      %p165 = scmp.eq.s32.totalorder %s23, 1
      %p166 = por %p164, %p165
      %p167 = scmp.ne.s32.totalorder %s159, %s162
      %p168 = scmp.eq.s32.totalorder %s23, 0
      %p169 = por %p167, %p168
      %p170 = scmp.ne.s32.totalorder %s159, %s162
      %p171 = scmp.eq.s32.totalorder %s28, 1
      %p172 = por %p170, %p171
      %p173 = scmp.ne.s32.totalorder %s162, %s163
      %p174 = scmp.eq.s32.totalorder %s28, 0
      %p175 = por %p173, %p174
      %p176 = scmp.ne.s32.totalorder %s162, %s163
      %p177 = scmp.eq.s32.totalorder %s29, 1
      %p178 = por %p176, %p177
      %p180 = scmp.ne.s32.totalorder %s163, %s179
      %p181 = scmp.eq.s32.totalorder %s29, 0
      %p182 = por %p180, %p181
      %p183 = scmp.le.s32.totalorder 1, %s23
      %p184 = scmp.lt.s32.totalorder %s23, 3
      %p185 = pnand %p183, %p184
      %p186 = pneg %p185
      // Predicated region
      $region9: #{tpu_custom_call.1} parent=5 // pred_check
        _
      $region10: #{tpu_custom_call.1} parent=5 // pred_check_branch
        %188 = sbr.rel (%p185) target = $region12
      $region11: #{tpu_custom_call.1} parent=5 // pred_region
        %s189 = ssub.s32 %s23, 1
      $region12: #{tpu_custom_call.1} parent=5 // pred_fallthru
        _
      %p190 = scmp.lt.s32.totalorder %s23, 2
      // Predicated region
      $region13: #{tpu_custom_call.1} parent=5 // pred_check
        %p191 = pneg %p190
      $region14: #{tpu_custom_call.1} parent=5 // pred_check_branch
        %193 = sbr.rel (%p191) target = $region16
      $region15: #{tpu_custom_call.1} parent=5 // pred_region
        // Predicated region
        $region17: #{tpu_custom_call.1} parent=15 // pred_check
          %p194 = pneg %p57
        $region18: #{tpu_custom_call.1} parent=15 // pred_check_branch
          %196 = sbr.rel (%p194) target = $region20
        $region19: #{tpu_custom_call.1} parent=15 // pred_region
          %s197 = sand.u32 %s47, 1
          %s198 = scalar_lea.sflag [#allocation3], %s197
          %s199 = sand.u32 %s47, 1
          %s200 = smul.addr %s199, 128
          %s201 = scalar_lea.vmem [#allocation2], %s200
          %s202 = smul.u32 2, %s31
          %204 = vsyncadd %s198, 0
          %s205 = smul.addr %s30, 16
          %s206 = sadd.s32 %s202, %s205
          %s207 = smul.addr %s206, 8
          %s208 = scalar_lea.hbm %s0, %s207
          %s209 = sshll.u32 %s208, 4
          %s210 = int_to_ptr.hbm [resolvable:$true] %s209
          %s211 = sshll.u32 %s201, 4
          %s212 = int_to_ptr.vmem [resolvable:$true] %s211
          %217 = dma.hbm_to_vmem [thread:$0]  %s210, 2048, %s212, %s198, 128, 128, 8
        $region20: #{tpu_custom_call.1} parent=15 // pred_fallthru
          _
        // Predicated region
        $region21: #{tpu_custom_call.1} parent=15 // pred_check
          %p218 = pneg %p85
        $region22: #{tpu_custom_call.1} parent=15 // pred_check_branch
          %220 = sbr.rel (%p218) target = $region24
        $region23: #{tpu_custom_call.1} parent=15 // pred_region
          %s221 = sand.u32 %s75, 1
          %s222 = scalar_lea.sflag [#allocation6], %s221
          %s223 = sand.u32 %s75, 1
          %s224 = smul.addr %s223, 16
          %s225 = scalar_lea.vmem [#allocation5], %s224
          %s226 = smul.u32 2, %s31
          %228 = vsyncadd %s222, 0
          %s229 = smul.addr %s30, 2
          %s230 = sadd.s32 %s226, %s229
          %s231 = smul.addr %s230, 8
          %s232 = scalar_lea.hbm %s1, %s231
          %s233 = sshll.u32 %s232, 4
          %s234 = int_to_ptr.hbm [resolvable:$true] %s233
          %s235 = sshll.u32 %s225, 4
          %s236 = int_to_ptr.vmem [resolvable:$true] %s235
          %241 = dma.hbm_to_vmem [thread:$0]  %s234, 256, %s236, %s222, 128, 128, 8
        $region24: #{tpu_custom_call.1} parent=15 // pred_fallthru
          _
      $region16: #{tpu_custom_call.1} parent=5 // pred_fallthru
        _
      %p242 = scmp.le.s32.totalorder 1, %s23
      %p243 = scmp.lt.s32.totalorder %s23, 3
      %p244 = pnand %p242, %p243
      %p245 = pneg %p244
      // Predicated region
      $region25: #{tpu_custom_call.1} parent=5 // pred_check
        _
      $region26: #{tpu_custom_call.1} parent=5 // pred_check_branch
        %247 = sbr.rel (%p244) target = $region28
      $region27: #{tpu_custom_call.1} parent=5 // pred_region
        %s248 = ssub.s32 %s23, 1
        %s249 = sand.u32 %s50, 1
        %s250 = scalar_lea.sflag [#allocation3], %s249
        %s251 = sand.u32 %s50, 1
        %s252 = smul.addr %s251, 128
        %s253 = scalar_lea.vmem [#allocation2], %s252
        // Predicated region
        $region29: #{tpu_custom_call.1} parent=27 // pred_check
          %p254 = pneg %p63
        $region30: #{tpu_custom_call.1} parent=27 // pred_check_branch
          %256 = sbr.rel (%p254) target = $region32
        $region31: #{tpu_custom_call.1} parent=27 // pred_region
          %258 = dma.done %s250, 2048
        $region32: #{tpu_custom_call.1} parent=27 // pred_fallthru
          _
        %s259 = sand.u32 %s78, 1
        %s260 = scalar_lea.sflag [#allocation6], %s259
        %s261 = sand.u32 %s78, 1
        %s262 = smul.addr %s261, 16
        %s263 = scalar_lea.vmem [#allocation5], %s262
        // Predicated region
        $region33: #{tpu_custom_call.1} parent=27 // pred_check
          %p264 = pneg %p91
        $region34: #{tpu_custom_call.1} parent=27 // pred_check_branch
          %266 = sbr.rel (%p264) target = $region36
        $region35: #{tpu_custom_call.1} parent=27 // pred_region
          %268 = dma.done %s260, 256
        $region36: #{tpu_custom_call.1} parent=27 // pred_fallthru
          _
        %s269 = sand.u32 %s50, 1
        %s270 = scalar_lea.sflag [#allocation3], %s269
        %s271 = sand.u32 %s50, 1
        %s272 = smul.addr %s271, 128
        %s273 = scalar_lea.vmem [#allocation2], %s272
        %p274 = pneg %p63
        %p275 = pneg %p60
        %s276 = sand.u32 %s78, 1
        %s277 = scalar_lea.sflag [#allocation6], %s276
        %s278 = sand.u32 %s78, 1
        %s279 = smul.addr %s278, 16
        %s280 = scalar_lea.vmem [#allocation5], %s279
        %p281 = pneg %p91
        %p282 = pneg %p88
        %p283 = pneg %p119
        %p284 = pneg %p116
        %s285 = sand.u32 %s106, 1
        %s286 = scalar_lea.sflag [#allocation4], %s285
        %s287 = sand.u32 %s106, 1
        %s288 = smul.addr %s287, 16
        %s289 = scalar_lea.vmem [#allocation7], %s288
        %p290 = pneg %p147
        %p291 = pneg %p144
        %s292 = sand.u32 %s28, 1
        %s293 = scalar_lea.sflag [#allocation9], %s292
        %s294 = sand.u32 %s134, 1
        %s295 = smul.addr %s294, 16
        %s296 = scalar_lea.vmem [#allocation8], %s295
        %p297 = pneg %p175
        %p298 = pneg %p172
        %s299 = sand.u32 %s28, 1
        %s300 = scalar_lea.sflag [#allocation9], %s299
        %s301 = sand.u32 %s162, 1
        %s302 = smul.addr %s301, 8
        %s303 = scalar_lea.vmem [#allocation10], %s302
        %s304 = smul.u32 2, %s33
        %s305 = smul.u32 2, %s33
        %s306 = smul.u32 2, %s33
        %s307 = smul.u32 2, %s33
        %v308 = vld [vmem:[%s263] sm:$0xff]
        %v309 = vld [vmem:[%s263 + $0x8] sm:$0xff]
        %s310 = smul.u32 %s33, 16
        %v311 = vlaneseq
        %v312 = vshrl.u32 %v311, 7
        %v313 = vadd.s32 %v312, 8
        %v314 = vstv %s310
        %v315 = vadd.s32 %v314, %v312
        %v316 = vadd.s32 %v314, %v313
        %vm317 = vcmp.ne.s32.totalorder %v308, 255
        %vm318 = vcmp.ne.s32.totalorder %v309, 255
        %vm319 = vcmp.lt.s32.totalorder %v315, 16
        %vm320 = vcmp.lt.s32.totalorder %v316, 16
        %vm321 = vmand %vm317, %vm319
        %vm322 = vmand %vm318, %vm320
        %v323 = vsel %vm321, %v308, 0
        %v324 = vsel %vm322, %v309, 0
        %v325 = vld [vmem:[%s253] sm:$0xff]
        %v326 = vld [vmem:[%s253 + $0x8] sm:$0xff]
        %s327 = scalar_lea.vmem %s253, 16 [#allocation2]
        %v328 = vld [vmem:[%s327] sm:$0xff]
        %v329 = vld [vmem:[%s327 + $0x8] sm:$0xff]
        %v330 = vmax.f32 %v325, %v328
        %v331 = vmax.f32 %v326, %v329
        %s332 = scalar_lea.vmem %s253, 32 [#allocation2]
        %v333 = vld [vmem:[%s332] sm:$0xff]
        %v334 = vld [vmem:[%s332 + $0x8] sm:$0xff]
        %v335 = vmax.f32 %v330, %v333
        %v336 = vmax.f32 %v331, %v334
        %s337 = scalar_lea.vmem %s253, 48 [#allocation2]
        %v338 = vld [vmem:[%s337] sm:$0xff]
        %v339 = vld [vmem:[%s337 + $0x8] sm:$0xff]
        %v340 = vmax.f32 %v335, %v338
        %v341 = vmax.f32 %v336, %v339
        %s342 = scalar_lea.vmem %s253, 64 [#allocation2]
        %v343 = vld [vmem:[%s342] sm:$0xff]
        %v344 = vld [vmem:[%s342 + $0x8] sm:$0xff]
        %v345 = vmax.f32 %v340, %v343
        %v346 = vmax.f32 %v341, %v344
        %s347 = scalar_lea.vmem %s253, 80 [#allocation2]
        %v348 = vld [vmem:[%s347] sm:$0xff]
        %v349 = vld [vmem:[%s347 + $0x8] sm:$0xff]
        %v350 = vmax.f32 %v345, %v348
        %v351 = vmax.f32 %v346, %v349
        %s352 = scalar_lea.vmem %s253, 96 [#allocation2]
        %v353 = vld [vmem:[%s352] sm:$0xff]
        %v354 = vld [vmem:[%s352 + $0x8] sm:$0xff]
        %v355 = vmax.f32 %v350, %v353
        %v356 = vmax.f32 %v351, %v354
        %s357 = scalar_lea.vmem %s253, 112 [#allocation2]
        %v358 = vld [vmem:[%s357] sm:$0xff]
        %v359 = vld [vmem:[%s357 + $0x8] sm:$0xff]
        %v360 = vmax.f32 %v355, %v358
        %v361 = vmax.f32 %v356, %v359
        %v362 = vsub.f32 %v325, %v360
        %v363 = vsub.f32 %v326, %v361
        %v364 = vmul.f32 %v362, 1.442695
        %v365 = vpow.pop %v364
        %v366 = vmul.f32 %v363, 1.442695
        %v367 = vpow.pop %v366
        %v368 = vadd.f32 %v365, 0.0
        %v369 = vadd.f32 %v367, 0.0
        %vm370 = vcmp.eq.s32.totalorder %v323, 0
        %vm371 = vcmp.eq.s32.totalorder %v324, 0
        %v372 = vsel %vm370, %v325, 0.0
        %v373 = vsel %vm371, %v326, 0.0
        %v374 = vsub.f32 %v328, %v360
        %v375 = vsub.f32 %v329, %v361
        %v376 = vmul.f32 %v374, 1.442695
        %v377 = vpow.pop %v376
        %v378 = vmul.f32 %v375, 1.442695
        %v379 = vpow.pop %v378
        %v380 = vadd.f32 %v368, %v377
        %v381 = vadd.f32 %v369, %v379
        %vm382 = vcmp.eq.s32.totalorder %v323, 1
        %vm383 = vcmp.eq.s32.totalorder %v324, 1
        %v384 = vsel %vm382, %v328, %v372
        %v385 = vsel %vm383, %v329, %v373
        %v386 = vsub.f32 %v333, %v360
        %v387 = vsub.f32 %v334, %v361
        %v388 = vmul.f32 %v386, 1.442695
        %v389 = vpow.pop %v388
        %v390 = vmul.f32 %v387, 1.442695
        %v391 = vpow.pop %v390
        %v392 = vadd.f32 %v380, %v389
        %v393 = vadd.f32 %v381, %v391
        %vm394 = vcmp.eq.s32.totalorder %v323, 2
        %vm395 = vcmp.eq.s32.totalorder %v324, 2
        %v396 = vsel %vm394, %v333, %v384
        %v397 = vsel %vm395, %v334, %v385
        %v398 = vsub.f32 %v338, %v360
        %v399 = vsub.f32 %v339, %v361
        %v400 = vmul.f32 %v398, 1.442695
        %v401 = vpow.pop %v400
        %v402 = vmul.f32 %v399, 1.442695
        %v403 = vpow.pop %v402
        %v404 = vadd.f32 %v392, %v401
        %v405 = vadd.f32 %v393, %v403
        %vm406 = vcmp.eq.s32.totalorder %v323, 3
        %vm407 = vcmp.eq.s32.totalorder %v324, 3
        %v408 = vsel %vm406, %v338, %v396
        %v409 = vsel %vm407, %v339, %v397
        %v410 = vsub.f32 %v343, %v360
        %v411 = vsub.f32 %v344, %v361
        %v412 = vmul.f32 %v410, 1.442695
        %v413 = vpow.pop %v412
        %v414 = vmul.f32 %v411, 1.442695
        %v415 = vpow.pop %v414
        %v416 = vadd.f32 %v404, %v413
        %v417 = vadd.f32 %v405, %v415
        %vm418 = vcmp.eq.s32.totalorder %v323, 4
        %vm419 = vcmp.eq.s32.totalorder %v324, 4
        %v420 = vsel %vm418, %v343, %v408
        %v421 = vsel %vm419, %v344, %v409
        %v422 = vsub.f32 %v348, %v360
        %v423 = vsub.f32 %v349, %v361
        %v424 = vmul.f32 %v422, 1.442695
        %v425 = vpow.pop %v424
        %v426 = vmul.f32 %v423, 1.442695
        %v427 = vpow.pop %v426
        %v428 = vadd.f32 %v416, %v425
        %v429 = vadd.f32 %v417, %v427
        %vm430 = vcmp.eq.s32.totalorder %v323, 5
        %vm431 = vcmp.eq.s32.totalorder %v324, 5
        %v432 = vsel %vm430, %v348, %v420
        %v433 = vsel %vm431, %v349, %v421
        %v434 = vsub.f32 %v353, %v360
        %v435 = vsub.f32 %v354, %v361
        %v436 = vmul.f32 %v434, 1.442695
        %v437 = vpow.pop %v436
        %v438 = vmul.f32 %v435, 1.442695
        %v439 = vpow.pop %v438
        %v440 = vadd.f32 %v428, %v437
        %v441 = vadd.f32 %v429, %v439
        %vm442 = vcmp.eq.s32.totalorder %v323, 6
        %vm443 = vcmp.eq.s32.totalorder %v324, 6
        %v444 = vsel %vm442, %v353, %v432
        %v445 = vsel %vm443, %v354, %v433
        %v446 = vsub.f32 %v358, %v360
        %v447 = vsub.f32 %v359, %v361
        %v448 = vmul.f32 %v446, 1.442695
        %v449 = vpow.pop %v448
        %v450 = vmul.f32 %v447, 1.442695
        %v451 = vpow.pop %v450
        %v452 = vadd.f32 %v440, %v449
        %v453 = vadd.f32 %v441, %v451
        %vm454 = vcmp.eq.s32.totalorder %v323, 7
        %vm455 = vcmp.eq.s32.totalorder %v324, 7
        %v456 = vsel %vm454, %v358, %v444
        %v457 = vsel %vm455, %v359, %v445
        %v458 = vlog2.pop %v452
        %v459 = vmul.f32 %v458, 0.6931472
        %v460 = vlog2.pop %v453
        %v461 = vmul.f32 %v460, 0.6931472
        %v462 = vadd.f32 %v360, %v459
        %v463 = vadd.f32 %v361, %v461
        %v464 = vsub.f32 %v462, %v456
        %v465 = vsub.f32 %v463, %v457
        %v466 = vmax.f32 %v464, 0.0
        %v467 = vmax.f32 %v465, 0.0
        %v468 = vsub.f32 %v456, %v462
        %v469 = vsub.f32 %v457, %v463
        %v470 = vmul.f32 %v468, 1.442695
        %v471 = vpow.pop %v470
        %v472 = vmul.f32 %v469, 1.442695
        %v473 = vpow.pop %v472
        %v474 = vsel %vm321, %v471, 1.0
        %v475 = vsel %vm322, %v473, 1.0
        %476 = vst [vmem:[%s289] sm:$0xff] %v474
        %477 = vst [vmem:[%s289 + $0x8] sm:$0xff] %v475
        %v478 = vsel %vm321, %v466, -1.0
        %v479 = vsel %vm322, %v467, -1.0
        %480 = vst [vmem:[%s296] sm:$0xff] %v478
        %481 = vst [vmem:[%s296 + $0x8] sm:$0xff] %v479
        %v482 = vsel %vm321, 1, 0
        %v483 = vsel %vm322, 1, 0
        %v484 = vadd.s32 %v482, %v483
        %v485 = vand.u32 %v484, 65535
        %v486 = vshrl.u32 %v484, 16
        %v487 = vcvt.s32.f32 %v485
        %v488 = vcvt.s32.f32 %v486
        %489 = vadd.xlane.f32.xlu0 %v487
        %v490 = vpop.xlane.xlu0 %489
        %491 = vadd.xlane.f32.xlu0 %v488
        %v492 = vpop.xlane.xlu0 %491
        %v493 = vcvt.f32.s32 %v490
        %v494 = vcvt.f32.s32 %v492
        %v495 = vshll.u32 %v494, 16
        %v496 = vadd.s32 %v495, %v493
        %v497 = vrot.slane %v496, 4
        %v498 = vadd.s32 %v496, %v497
        %v499 = vrot.slane %v498, 2
        %v500 = vadd.s32 %v498, %v499
        %v501 = vrot.slane %v500, 1
        %v502 = vadd.s32 %v500, %v501
        %s503 = vtos %v502
        %v504 = vlaneseq
        %v505 = vand.u32 %v504, 127
        %vm506 = vcmp.eq.s32.totalorder %v312, 0
        %vm507 = vcmp.eq.s32.totalorder %v505, 0
        %vm508 = vmand %vm506, %vm507
        %v509 = vstv %s503
        %v510 = vsel %vm508, %v509, 0
        %511 = vst [vmem:[%s303] sm:$0xff] %v510
        %s512 = sand.u32 %s106, 1
        %s513 = scalar_lea.sflag [#allocation4], %s512
        %s514 = sand.u32 %s106, 1
        %s515 = smul.addr %s514, 16
        %s516 = scalar_lea.vmem [#allocation7], %s515
        %s517 = sand.u32 %s28, 1
        %s518 = scalar_lea.sflag [#allocation9], %s517
        %s519 = sand.u32 %s134, 1
        %s520 = smul.addr %s519, 16
        %s521 = scalar_lea.vmem [#allocation8], %s520
        %s522 = sand.u32 %s28, 1
        %s523 = scalar_lea.sflag [#allocation9], %s522
        %s524 = sand.u32 %s162, 1
        %s525 = smul.addr %s524, 8
        %s526 = scalar_lea.vmem [#allocation10], %s525
        // Predicated region
        $region37: #{tpu_custom_call.1} parent=27 // pred_check
          %p527 = pneg %p116
        $region38: #{tpu_custom_call.1} parent=27 // pred_check_branch
          %529 = sbr.rel (%p527) target = $region40
        $region39: #{tpu_custom_call.1} parent=27 // pred_region
          %s530 = smul.u32 2, %s33
          %532 = vsyncadd %s513, 0
          %s533 = smul.addr %s32, 2
          %s534 = sadd.s32 %s530, %s533
          %s535 = smul.addr %s534, 8
          %s536 = scalar_lea.hbm %s2, %s535
          %s537 = sshll.u32 %s516, 4
          %s538 = int_to_ptr.vmem [resolvable:$true] %s537
          %s539 = sshll.u32 %s536, 4
          %s540 = int_to_ptr.hbm [resolvable:$true] %s539
          %545 = dma.vmem_to_hbm [thread:$0]  %s538, 256, %s540, %s513, 128, 128, 8
        $region40: #{tpu_custom_call.1} parent=27 // pred_fallthru
          _
        // Predicated region
        $region41: #{tpu_custom_call.1} parent=27 // pred_check
          %p546 = pneg %p144
        $region42: #{tpu_custom_call.1} parent=27 // pred_check_branch
          %548 = sbr.rel (%p546) target = $region44
        $region43: #{tpu_custom_call.1} parent=27 // pred_region
          %s549 = smul.u32 2, %s33
          %551 = vsyncadd %s518, 0
          %s552 = smul.addr %s32, 2
          %s553 = sadd.s32 %s549, %s552
          %s554 = smul.addr %s553, 8
          %s555 = scalar_lea.hbm %s3, %s554
          %s556 = sshll.u32 %s521, 4
          %s557 = int_to_ptr.vmem [resolvable:$true] %s556
          %s558 = sshll.u32 %s555, 4
          %s559 = int_to_ptr.hbm [resolvable:$true] %s558
          %564 = dma.vmem_to_hbm [thread:$0]  %s557, 256, %s559, %s518, 128, 128, 8
        $region44: #{tpu_custom_call.1} parent=27 // pred_fallthru
          _
        // Predicated region
        $region45: #{tpu_custom_call.1} parent=27 // pred_check
          %p565 = pneg %p172
        $region46: #{tpu_custom_call.1} parent=27 // pred_check_branch
          %567 = sbr.rel (%p565) target = $region48
        $region47: #{tpu_custom_call.1} parent=27 // pred_region
          %569 = vsyncadd %s523, 0
          %s570 = sadd.s32 %s33, %s32
          %s571 = smul.addr %s570, 8
          %s572 = scalar_lea.hbm %s4, %s571
          %s574 = sshll.u32 %s526, 4
          %s575 = int_to_ptr.vmem [resolvable:$true] %s574
          %s576 = sshll.u32 %s572, 4
          %s577 = int_to_ptr.hbm [resolvable:$true] %s576
          %579 = dma.vmem_to_hbm [thread:$0]  %s575, 128, %s577, %s523
        $region48: #{tpu_custom_call.1} parent=27 // pred_fallthru
          _
      $region28: #{tpu_custom_call.1} parent=5 // pred_fallthru
        _
      %p580 = scmp.le.s32.totalorder 2, %s23
      // Predicated region
      $region49: #{tpu_custom_call.1} parent=5 // pred_check
        %p581 = pneg %p580
      $region50: #{tpu_custom_call.1} parent=5 // pred_check_branch
        %583 = sbr.rel (%p581) target = $region52
      $region51: #{tpu_custom_call.1} parent=5 // pred_region
        %s584 = ssub.s32 %s23, 2
        // Predicated region
        $region53: #{tpu_custom_call.1} parent=51 // pred_check
          %p585 = pneg %p122
        $region54: #{tpu_custom_call.1} parent=51 // pred_check_branch
          %587 = sbr.rel (%p585) target = $region56
        $region55: #{tpu_custom_call.1} parent=51 // pred_region
          %s588 = sand.u32 %s107, 1
          %s589 = scalar_lea.sflag [#allocation4], %s588
          %s590 = sand.u32 %s107, 1
          %s591 = smul.addr %s590, 16
          %s592 = scalar_lea.vmem [#allocation7], %s591
          %594 = dma.done %s589, 256
        $region56: #{tpu_custom_call.1} parent=51 // pred_fallthru
          _
        // Predicated region
        $region57: #{tpu_custom_call.1} parent=51 // pred_check
          %p595 = pneg %p150
        $region58: #{tpu_custom_call.1} parent=51 // pred_check_branch
          %597 = sbr.rel (%p595) target = $region60
        $region59: #{tpu_custom_call.1} parent=51 // pred_region
          %s598 = sand.u32 %s29, 1
          %s599 = scalar_lea.sflag [#allocation9], %s598
          %s600 = sand.u32 %s135, 1
          %s601 = smul.addr %s600, 16
          %s602 = scalar_lea.vmem [#allocation8], %s601
          %604 = dma.done %s599, 256
        $region60: #{tpu_custom_call.1} parent=51 // pred_fallthru
          _
        // Predicated region
        $region61: #{tpu_custom_call.1} parent=51 // pred_check
          %p605 = pneg %p178
        $region62: #{tpu_custom_call.1} parent=51 // pred_check_branch
          %607 = sbr.rel (%p605) target = $region64
        $region63: #{tpu_custom_call.1} parent=51 // pred_region
          %s608 = sand.u32 %s29, 1
          %s609 = scalar_lea.sflag [#allocation9], %s608
          %s610 = sand.u32 %s163, 1
          %s611 = smul.addr %s610, 8
          %s612 = scalar_lea.vmem [#allocation10], %s611
          %614 = dma.done %s609, 128
        $region64: #{tpu_custom_call.1} parent=51 // pred_fallthru
          _
      $region52: #{tpu_custom_call.1} parent=5 // pred_fallthru
        _
    $region6: #{tpu_custom_call.1} parent=1 // loop_footer
      %s27 = sadd.s32 1, %s23
    $region7: #{tpu_custom_call.1} parent=1 // loop_footer_branch
      %22 = sbr.rel target = $region3
    $region8: #{tpu_custom_call.1} parent=1 // loop_exit
      _
    %615 = vsyncpa [#allocation3], 1
    %s616 = scalar_lea.sflag [#allocation3], 1
    %617 = vsyncpa %s616, 1
    %618 = vsyncpa [#allocation6], 1
    %s619 = scalar_lea.sflag [#allocation6], 1
    %620 = vsyncpa %s619, 1
    %621 = vsyncpa [#allocation4], 1
    %s622 = scalar_lea.sflag [#allocation4], 1
    %623 = vsyncpa %s622, 1
    %624 = vsyncpa [#allocation9], 1
    %s625 = scalar_lea.sflag [#allocation9], 1
    %626 = vsyncpa %s625, 1

</llo_original>
